<compile_context>
chip_gen: v5e
topology: v5e:2x2
jax: 0.10.0
libtpu: 0.0.40
codegen_flags: <defaults>
</compile_context>

<pallas_src>
import functools

import jax
import jax.numpy as jnp
from jax import lax
from jax.experimental import pallas as pl
from jax.experimental.pallas import tpu as pltpu

LANE = 128
SUBLANE = 8
# Weights below this many bytes are batched into a tiny per-dtype slab; weights
# at/above it are read directly from their own HBM buffer (no slab).
_SMALL_MAX_BYTES = 512 * 1024


def _cdiv(a, b):
    return -(-a // b)


def _round_up(x, m):
    return _cdiv(x, m) * m


def _tpu_budgets():
    """(row-tile target bytes, vmem_limit_bytes) per TPU generation.

    v5e/v6e (128 MiB VMEM): 4 MiB row tiles, 64 MiB scoped limit.
    v7x     ( 64 MiB VMEM): 2 MiB row tiles, 44 MiB scoped limit.
    """
    vmem_cap = 128 * 1024 * 1024
    try:
        vmem_cap = int(pltpu.get_tpu_info().vmem_capacity_bytes)
    except Exception:
        pass
    if vmem_cap <= 64 * 1024 * 1024:
        return 2 * 1024 * 1024, 44 * 1024 * 1024
    return 4 * 1024 * 1024, 64 * 1024 * 1024


# ---------------------------------------------------------------------------
# Kernel A: direct per-weight sum-of-squares (large weights, no mask work).
# ---------------------------------------------------------------------------
def _ssq_lane_kernel(x_ref, out_ref, *, tile_rows, valid_rows):
    """x_ref: (tile_rows, 128) native dtype; out_ref: (1, 1, 128) f32 per-lane partial.

    `valid_rows` is a static Python int (or None) — it is only set when the last
    grid step's block hangs past the end of the array, in which case the
    out-of-bounds rows (unspecified DMA contents) are masked to zero.
    """
    x = x_ref[...].astype(jnp.float32)          # upcast in-vreg; bf16 stays bf16 in HBM
    x2 = x * x
    if valid_rows is not None:
        grow = pl.program_id(0) * tile_rows + lax.broadcasted_iota(
            jnp.int32, (tile_rows, 1), 0)
        x2 = jnp.where(grow < valid_rows, x2, 0.0)
    # Cross-sublane reduce only; the cross-lane reduce happens in the JAX epilogue,
    # so the (1, 128) output store is a full, unmasked lane-dense vst.
    out_ref[...] = jnp.sum(x2, axis=0, keepdims=True).reshape(out_ref.shape)


def _ssq_direct(w, tile_bytes, vmem_limit):
    """Sum of squares of one (large) weight, read directly from its HBM buffer."""
    dt = w.dtype if jnp.issubdtype(w.dtype, jnp.floating) else jnp.float32
    flat = jnp.ravel(w)                          # free bitcast for contiguous arrays
    if flat.dtype != dt:
        flat = flat.astype(dt)
    n = flat.shape[0]
    rows = max(_cdiv(n, LANE), SUBLANE)
    if rows * LANE != n:
        # Free when size % 128 == 0 (typical for linear/conv/embedding weights);
        # otherwise a small pad copy.
        # TODO(synk): handle ragged tails without padding for huge unaligned weights.
        flat = jnp.pad(flat, (0, rows * LANE - n))
    x = flat.reshape(rows, LANE)                 # lane-dense HBM view, native dtype

    itemsize = jnp.dtype(dt).itemsize
    tr = max(SUBLANE, (tile_bytes // (LANE * itemsize)) // SUBLANE * SUBLANE)
    tr = min(tr, _round_up(rows, SUBLANE))
    if rows > SUBLANE and _cdiv(rows, tr) < 2:
        # Keep >= 2 tiles so the "parallel" grid axis can split across both
        # TensorCores on v7x (megacore).
        tr = max(SUBLANE, _round_up(_cdiv(rows, 2), SUBLANE))
    n_tiles = _cdiv(rows, tr)
    valid_rows = rows if rows % tr != 0 else None   # mask only when the last block is ragged

    partials = pl.pallas_call(
        functools.partial(_ssq_lane_kernel, tile_rows=tr, valid_rows=valid_rows),
        out_shape=jax.ShapeDtypeStruct((n_tiles, 1, LANE), jnp.float32),
        grid_spec=pltpu.PrefetchScalarGridSpec(
            num_scalar_prefetch=0,
            grid=(n_tiles,),
            in_specs=[pl.BlockSpec((tr, LANE), lambda t: (t, 0))],
            out_specs=pl.BlockSpec((1, 1, LANE), lambda t: (t, 0, 0)),
        ),
        compiler_params=pltpu.CompilerParams(
            dimension_semantics=("parallel",),    # disjoint per-tile outputs
            vmem_limit_bytes=vmem_limit,
        ),
    )(x)
    return jnp.sum(partials)                     # tiny JAX epilogue


# ---------------------------------------------------------------------------
# Kernel B: batched per-weight sum-of-squares for the SMALL weights of one dtype.
# ---------------------------------------------------------------------------
def _ssq_seg_kernel(x_ref, starts_ref, ends_ref, out_ref, *, tile_rows):
    """x_ref: (tile_rows, 128) slab tile; starts/ends: (1, n_pad) segment bounds;
    out_ref: (1, 1, n_pad) f32 per-weight partial sums-of-squares."""
    t = pl.program_id(0)
    x = x_ref[...].astype(jnp.float32)
    ssq_rows = jnp.sum(x * x, axis=1, keepdims=True)                 # (tile_rows, 1)
    grow = t * tile_rows + lax.broadcasted_iota(jnp.int32, (tile_rows, 1), 0)
    in_seg = (grow >= starts_ref[...]) & (grow < ends_ref[...])      # (tile_rows, n_pad)
    partial = jnp.sum(jnp.where(in_seg, ssq_rows, 0.0), axis=0, keepdims=True)
    out_ref[...] = partial.reshape(out_ref.shape)


def _ssq_grouped(ws, dt, tile_bytes, vmem_limit):
    """Per-weight sum of squares for a list of small same-dtype weights.

    The concat here only ever touches small tensors, so the extra HBM traffic is
    negligible; it buys one grid step shared by many tiny weights instead of one
    pallas_call per weight.
    """
    itemsize = jnp.dtype(dt).itemsize
    pieces, starts, ends = [], [], []
    row = 0
    for w in ws:
        flat = jnp.ravel(w)
        if flat.dtype != dt:
            flat = flat.astype(dt)
        n = flat.shape[0]
        r = _cdiv(n, LANE)
        if r * LANE != n:
            flat = jnp.pad(flat, (0, r * LANE - n))
        pieces.append(flat.reshape(r, LANE))
        starts.append(row)
        ends.append(row + r)
        row += r
    r_total = row

    tr = max(SUBLANE, (tile_bytes // (LANE * itemsize)) // SUBLANE * SUBLANE)
    tr = min(tr, _round_up(r_total, SUBLANE))
    r_padded = _round_up(r_total, tr)
    if r_padded > r_total:
        pieces.append(jnp.zeros((r_padded - r_total, LANE), dt))
    x = jnp.concatenate(pieces, axis=0)          # small slab, native dtype
    n_tiles = r_padded // tr

    n_w = len(ws)
    n_pad = _round_up(n_w, LANE)                 # lane-dense per-weight axis
    pad = [0] * (n_pad - n_w)                    # empty pad segments: start == end == 0
    starts_a = jnp.asarray([starts + pad], dtype=jnp.int32)   # (1, n_pad)
    ends_a = jnp.asarray([ends + pad], dtype=jnp.int32)       # (1, n_pad)

    partials = pl.pallas_call(
        functools.partial(_ssq_seg_kernel, tile_rows=tr),
        out_shape=jax.ShapeDtypeStruct((n_tiles, 1, n_pad), jnp.float32),
        grid_spec=pltpu.PrefetchScalarGridSpec(
            num_scalar_prefetch=0,
            grid=(n_tiles,),
            in_specs=[
                pl.BlockSpec((tr, LANE), lambda t: (t, 0)),
                pl.BlockSpec((1, n_pad), lambda t: (0, 0)),   # constant block -> DMA deduped
                pl.BlockSpec((1, n_pad), lambda t: (0, 0)),
            ],
            out_specs=pl.BlockSpec((1, 1, n_pad), lambda t: (t, 0, 0)),
        ),
        compiler_params=pltpu.CompilerParams(
            dimension_semantics=("parallel",),
            vmem_limit_bytes=vmem_limit,
        ),
    )(x, starts_a, ends_a)
    return jnp.sum(partials, axis=(0, 1))[:n_w]


# ---------------------------------------------------------------------------
# Forward: gamma * sum_i ||w_i||_2  (Regularization.forward)
# ---------------------------------------------------------------------------
def regularization_loss(weight_list, gamma=0.01, p=2, small_max_bytes=_SMALL_MAX_BYTES):
    if gamma <= 0:
        raise ValueError("param weight_decay can not be <= 0")
    assert p == 2, "only p=2 (L2 / Frobenius norm) implemented"  # TODO(synk): general p-norm

    ws = [w for _, w in weight_list if w.size > 0]
    if not ws:
        return jnp.asarray(0.0, jnp.float32)

    tile_bytes, vmem_limit = _tpu_budgets()

    norms = []               # per-weight / per-group L2 norms (0-d f32)
    small_groups = {}        # normalized dtype -> list of small weights
    for w in ws:
        dt = w.dtype if jnp.issubdtype(w.dtype, jnp.floating) else jnp.float32
        if w.size * jnp.dtype(dt).itemsize >= small_max_bytes:
            norms.append(jnp.sqrt(_ssq_direct(w, tile_bytes, vmem_limit)))
        else:
            small_groups.setdefault(jnp.dtype(dt), []).append(w)

    for dt, group in small_groups.items():
        ssq_vec = _ssq_grouped(group, dt, tile_bytes, vmem_limit)
        norms.append(jnp.sum(jnp.sqrt(ssq_vec)))

    total = norms[0]
    for nrm in norms[1:]:
        total = total + nrm
    return jnp.asarray(gamma, jnp.float32) * total


def get_weight_list(named_params):
    """Mirror of Regularization.get_weight_list: keep params whose name contains 'weight'."""
    return [(name, p) for name, p in named_params.items() if "weight" in name]


class Regularization:
    """JAX/Pallas mirror of the torch Regularization module (p=2)."""

    def __init__(self, named_params, gamma=0.01, p=2):
        if gamma <= 0:
            raise ValueError("param weight_decay can not be <= 0")
        self.gamma = gamma
        self.p = p
        self.weight_list = get_weight_list(named_params)

    def __call__(self, named_params):
        self.weight_list = get_weight_list(named_params)
        return regularization_loss(self.weight_list, self.gamma, self.p)


def _reference_loss(weight_list, gamma):
    return gamma * sum(
        jnp.sqrt(jnp.sum(jnp.square(w.astype(jnp.float32)))) for _, w in weight_list
    )


if __name__ == "__main__":
    # Deterministic synthetic "model" parameters (tiny conv + bn + linears + a
    # medium embedding that exercises the direct per-weight tiled path).
    key = jax.random.PRNGKey(0)
    keys = jax.random.split(key, 7)
    named_params = {
        "conv1.weight": jax.random.normal(keys[0], (4, 3, 3, 3), jnp.float32) * 0.1,
        "conv1.bias": jax.random.normal(keys[1], (4,), jnp.float32) * 0.1,
        "bn1.weight": 1.0 + jax.random.normal(keys[2], (4,), jnp.float32) * 0.1,
        "fc1.weight": jax.random.normal(keys[3], (32, 64), jnp.float32) * 0.1,
        "fc1.bias": jax.random.normal(keys[4], (32,), jnp.float32) * 0.1,
        "fc2.weight": jax.random.normal(keys[5], (10, 32), jnp.float32) * 0.1,
        "emb.weight": jax.random.normal(keys[6], (520, 384), jnp.float32) * 0.02,
    }
    gamma = 0.01

    # --- 1) f32 model via the module-like wrapper (direct path + f32 small slab) ---
    reg = Regularization(named_params, gamma=gamma, p=2)
    loss = jax.block_until_ready(reg(named_params))
    ref = _reference_loss(get_weight_list(named_params), gamma)
    assert jnp.allclose(loss, ref, rtol=1e-5, atol=1e-6), (float(loss), float(ref))

    # --- 2) all-bf16 model, default routing (native bf16 small slab) ---
    named_bf16 = {k: v.astype(jnp.bfloat16) for k, v in named_params.items()}
    wl_bf16 = get_weight_list(named_bf16)
    loss_bf16 = jax.block_until_ready(regularization_loss(wl_bf16, gamma=gamma, p=2))
    ref_bf16 = _reference_loss(wl_bf16, gamma)
    assert jnp.allclose(loss_bf16, ref_bf16, rtol=1e-4, atol=1e-6), (
        float(loss_bf16), float(ref_bf16))

    # --- 3) all-bf16, force every weight through the direct path (covers tiny /
    #        ragged / masked-boundary cases of the no-slab kernel) ---
    loss_dir = jax.block_until_ready(
        regularization_loss(wl_bf16, gamma=gamma, p=2, small_max_bytes=0))
    assert jnp.allclose(loss_dir, ref_bf16, rtol=1e-4, atol=1e-6), (
        float(loss_dir), float(ref_bf16))

    # --- 4) mixed precision model (per-dtype grouping: one f32 slab + one bf16 slab) ---
    named_mixed = dict(named_params)
    for k in ("fc1.weight", "fc2.weight", "emb.weight", "fc1.bias"):
        named_mixed[k] = named_params[k].astype(jnp.bfloat16)
    wl_mixed = get_weight_list(named_mixed)
    loss_mixed = jax.block_until_ready(regularization_loss(wl_mixed, gamma=gamma, p=2))
    ref_mixed = _reference_loss(wl_mixed, gamma)
    assert jnp.allclose(loss_mixed, ref_mixed, rtol=1e-4, atol=1e-6), (
        float(loss_mixed), float(ref_mixed))

    print("KERNEL_OK")
</pallas_src>

<mosaic_0001>
module attributes {stable_mosaic.version = 11 : i64} {
  func.func @_ssq_lane_kernel(%arg0: i32, %arg1: memref<784x128xf32, #tpu.memory_space<vmem>>, %arg2: memref<1x1x128xf32, #tpu.memory_space<vmem>>) attributes {dimension_semantics = [#tpu.dimension_semantics<parallel>], iteration_bounds = array<i64: 2>, scalar_prefetch = 0 : i64, scratch_operands = 0 : i64, tpu.core_type = #tpu.core_type<tc>, window_params = [{transform_indices = @transform_0, window_bounds = array<i64: 784, 128>}, {transform_indices = @transform_1, window_bounds = array<i64: 1, 1, 128>}]} {
    %c0 = arith.constant 0 : index
    %c0_0 = arith.constant 0 : index
    %0 = vector.load %arg1[%c0, %c0_0] : memref<784x128xf32, #tpu.memory_space<vmem>>, vector<784x128xf32>
    %1 = arith.mulf %0, %0 : vector<784x128xf32>
    %c784_i32 = arith.constant 784 : i32
    %2 = arith.muli %arg0, %c784_i32 : i32
    %3 = tpu.iota {dimensions = array<i32: 0>} : vector<784x1xi32>
    %4 = vector.broadcast %2 : i32 to vector<784x1xi32>
    %5 = arith.addi %4, %3 : vector<784x1xi32>
    %c1560_i32 = arith.constant 1560 : i32
    %6 = vector.broadcast %c1560_i32 : i32 to vector<784x1xi32>
    %7 = arith.cmpi slt, %5, %6 : vector<784x1xi32>
    %cst = arith.constant 0.000000e+00 : f32
    %8 = vector.shape_cast %7 : vector<784x1xi1> to vector<784x1xi1>
    %9 = vector.broadcast %8 : vector<784x1xi1> to vector<784x128xi1>
    %10 = vector.broadcast %cst : f32 to vector<784x128xf32>
    %11 = arith.select %9, %1, %10 : vector<784x128xi1>, vector<784x128xf32>
    %cst_1 = arith.constant dense<0.000000e+00> : vector<128xf32>
    %12 = vector.multi_reduction <add>, %11, %cst_1 [0] : vector<784x128xf32> to vector<128xf32>
    %13 = vector.shape_cast %12 : vector<128xf32> to vector<1x128xf32>
    %14 = vector.shape_cast %13 : vector<1x128xf32> to vector<1x1x128xf32>
    %c0_2 = arith.constant 0 : index
    %c0_3 = arith.constant 0 : index
    %c0_4 = arith.constant 0 : index
    %15 = vector.load %arg2[%c0_2, %c0_3, %c0_4] : memref<1x1x128xf32, #tpu.memory_space<vmem>>, vector<1x1x128xf32>
    tpu.vector_store %arg2[%c0_2, %c0_3, %c0_4], %14 {strides = array<i32>} : memref<1x1x128xf32, #tpu.memory_space<vmem>>, vector<1x1x128xf32>,
    return
  }
  func.func @transform_0(%arg0: i32) -> (i32, i32) {
    %c0_i32 = arith.constant 0 : i32
    %c0_i32_0 = arith.constant 0 : i32
    return %arg0, %c0_i32 : i32, i32
  }
  func.func @transform_1(%arg0: i32) -> (i32, i32, i32) {
    %c0_i32 = arith.constant 0 : i32
    %c0_i32_0 = arith.constant 0 : i32
    %c0_i32_1 = arith.constant 0 : i32
    return %arg0, %c0_i32, %c0_i32_0 : i32, i32, i32
  }
}

</mosaic_0001>

<llo_original>
// kernel: tpu_custom_call.1
$region0: #{tpu_custom_call.1}
  #allocation0 [shape = 'u32[]', space=smem, size = 0x4, offset = 0x4, fixed_abs, tag = 'smem constant byte address 0x4 - core index']
  #allocation1 [shape = 'u32[72,128]{1,0:T(1,128)}', space=vmem, size = 0x9000, scoped, tag = 'internal scratch']
  %s0 = inlined_call_operand.hbm [shape: f32[1560,128], index: 0, kind: input, shape index: {}]
  %s1 = inlined_call_operand.hbm [shape: f32[2,1,128], index: 1, kind: output, shape index: {}]
  %s2 = sld [smem:[#allocation0]]
  $region41: #{tpu_custom_call.1} parent=0
    _
  %s4 = ssub.s32 1, %s2
  %s5 = scalar_select 0, %s4, %s2
  $region1: #{tpu_custom_call.1} parent=0
    #allocation2 [shape = 'u8[802816]{0}', space=vmem, size = 0xc4000, scoped, tag = 'input window, operand 0']
    #allocation3 [shape = 's32[2]{0}', space=sflag, size = 0x8, scoped, tag = 'scoped memory for tpu_custom_call.1']
    #allocation4 [shape = 's32[2]{0}', space=sflag, size = 0x8, scoped, tag = 'scoped memory for tpu_custom_call.1']
    #allocation5 [shape = 'u8[1024]{0}', space=vmem, size = 0x400, scoped, tag = 'output window, operand 0']
    %6 = vsyncpa [#allocation3], 0
    %s7 = scalar_lea.sflag [#allocation3], 1
    %8 = vsyncpa %s7, 0
    %9 = vsyncpa [#allocation4], 0
    %s10 = scalar_lea.sflag [#allocation4], 1
    %11 = vsyncpa %s10, 0
    loop: start=0, step=1, limit=4
    $region2: #{tpu_custom_call.1} parent=1 // loop_pre_header
      _
    $region3: #{tpu_custom_call.1} parent=1 // loop_header
      %s13 = sphi 0, %s17
      %p14 = scmp.ge.s32.totalorder %s13, 4
      %s23 = sphi 0, %s25
      %s26 = sphi 0, %s23
      %s27 = sphi 0, %s26
      %s43 = sphi 0, %s27
      %s49 = sphi 0, %s51
      %s52 = sphi 0, %s49
      %s53 = sphi 0, %s52
      %s69 = sphi 0, %s53
    $region4: #{tpu_custom_call.1} parent=1 // loop_header_branch
      %16 = sbr.rel (%p14) target = $region8
    $region5: #{tpu_custom_call.1} parent=1 // loop_body
      %s18 = ssub.s32 %s13, 1
      %s19 = ssub.s32 %s13, 2
      %s20 = sadd.s32 %s13, 1
      %s21 = ssub.s32 %s13, %s20
      %p22 = scmp.eq.s32.totalorder %s21, 0
      %s24 = sadd.s32 %s23, 1
      %s25 = scalar_select %p22, %s23, %s24
      %p28 = pneg %p22
      %p29 = scmp.eq.s32.totalorder %s13, 1
      %p30 = por %p28, %p29
      %p31 = scmp.ne.s32.totalorder %s23, %s26
      %p32 = scmp.eq.s32.totalorder %s13, 0
      %p33 = por %p31, %p32
      %p34 = scmp.ne.s32.totalorder %s23, %s26
      %p35 = scmp.eq.s32.totalorder %s18, 1
      %p36 = por %p34, %p35
      %p37 = scmp.ne.s32.totalorder %s26, %s27
      %p38 = scmp.eq.s32.totalorder %s18, 0
      %p39 = por %p37, %p38
      %p40 = scmp.ne.s32.totalorder %s26, %s27
      %p41 = scmp.eq.s32.totalorder %s19, 1
      %p42 = por %p40, %p41
      %p44 = scmp.ne.s32.totalorder %s27, %s43
      %p45 = scmp.eq.s32.totalorder %s19, 0
      %p46 = por %p44, %p45
      %s47 = ssub.s32 %s13, %s20
      %p48 = scmp.eq.s32.totalorder %s47, 0
      %s50 = sadd.s32 %s49, 1
      %s51 = scalar_select %p48, %s49, %s50
      %p54 = pneg %p48
      %p55 = scmp.eq.s32.totalorder %s13, 1
      %p56 = por %p54, %p55
      %p57 = scmp.ne.s32.totalorder %s49, %s52
      %p58 = scmp.eq.s32.totalorder %s13, 0
      %p59 = por %p57, %p58
      %p60 = scmp.ne.s32.totalorder %s49, %s52
      %p61 = scmp.eq.s32.totalorder %s18, 1
      %p62 = por %p60, %p61
      %p63 = scmp.ne.s32.totalorder %s52, %s53
      %p64 = scmp.eq.s32.totalorder %s18, 0
      %p65 = por %p63, %p64
      %p66 = scmp.ne.s32.totalorder %s52, %s53
      %p67 = scmp.eq.s32.totalorder %s19, 1
      %p68 = por %p66, %p67
      %p70 = scmp.ne.s32.totalorder %s53, %s69
      %p71 = scmp.eq.s32.totalorder %s19, 0
      %p72 = por %p70, %p71
      %p73 = scmp.le.s32.totalorder 1, %s13
      %p74 = scmp.lt.s32.totalorder %s13, 3
      %p75 = pnand %p73, %p74
      %p76 = pneg %p75
      // Predicated region
      $region9: #{tpu_custom_call.1} parent=5 // pred_check
        _
      $region10: #{tpu_custom_call.1} parent=5 // pred_check_branch
        %78 = sbr.rel (%p75) target = $region12
      $region11: #{tpu_custom_call.1} parent=5 // pred_region
        %s79 = ssub.s32 %s13, 1
      $region12: #{tpu_custom_call.1} parent=5 // pred_fallthru
        _
      %p80 = scmp.lt.s32.totalorder %s13, 2
      // Predicated region
      $region13: #{tpu_custom_call.1} parent=5 // pred_check
        %p81 = pneg %p80
      $region14: #{tpu_custom_call.1} parent=5 // pred_check_branch
        %83 = sbr.rel (%p81) target = $region16
      $region15: #{tpu_custom_call.1} parent=5 // pred_region
        // Predicated region
        $region17: #{tpu_custom_call.1} parent=15 // pred_check
          %p84 = pneg %p33
        $region18: #{tpu_custom_call.1} parent=15 // pred_check_branch
          %86 = sbr.rel (%p84) target = $region20
        $region19: #{tpu_custom_call.1} parent=15 // pred_region
          %s87 = sand.u32 %s23, 1
          %s88 = scalar_lea.sflag [#allocation3], %s87
          %s89 = sand.u32 %s23, 1
          %s90 = smul.addr %s89, 784
          %s91 = scalar_lea.vmem [#allocation2], %s90
          %s92 = smul.u32 98, %s13
          %s93 = ssub.s32 195, %s92
          %p94 = scmp.lt.s32.totalorder %s93, 98
          %s95 = scalar_select %p94, %s93, 98
          %s96 = smul.u32 8, %s95
          %s97 = ssub.s32 784, %s96
          %s98 = sshll.u32 %s97, 4
          %99 = vsyncadd %s88, %s98
          %p100 = scmp.ne.s32.totalorder 0, %s96
          %s101 = smul.addr %s92, 8
          %s102 = scalar_lea.hbm %s0, %s101
          %s103 = smul.u32 8, %s95
          %s104 = sshll.u32 %s102, 4
          %s105 = int_to_ptr.hbm [resolvable:$true] %s104
          %s106 = sshll.u32 %s91, 4
          %s107 = int_to_ptr.vmem [resolvable:$true] %s106
          %s108 = sshll.u32 %s103, 4
          %112 = dma.hbm_to_vmem [thread:$0]  (%p100), %s105, %s108, %s107, %s88, 128, 128, 8
        $region20: #{tpu_custom_call.1} parent=15 // pred_fallthru
          _
      $region16: #{tpu_custom_call.1} parent=5 // pred_fallthru
        _
      %p113 = scmp.le.s32.totalorder 1, %s13
      %p114 = scmp.lt.s32.totalorder %s13, 3
      %p115 = pnand %p113, %p114
      %p116 = pneg %p115
      // Predicated region
      $region21: #{tpu_custom_call.1} parent=5 // pred_check
        _
      $region22: #{tpu_custom_call.1} parent=5 // pred_check_branch
        %118 = sbr.rel (%p115) target = $region24
      $region23: #{tpu_custom_call.1} parent=5 // pred_region
        %s119 = ssub.s32 %s13, 1
        %s120 = sand.u32 %s26, 1
        %s121 = scalar_lea.sflag [#allocation3], %s120
        %s122 = sand.u32 %s26, 1
        %s123 = smul.addr %s122, 784
        %s124 = scalar_lea.vmem [#allocation2], %s123
        // Predicated region
        $region25: #{tpu_custom_call.1} parent=23 // pred_check
          %p125 = pneg %p39
        $region26: #{tpu_custom_call.1} parent=23 // pred_check_branch
          %127 = sbr.rel (%p125) target = $region28
        $region27: #{tpu_custom_call.1} parent=23 // pred_region
          %129 = dma.done %s121, 12544
        $region28: #{tpu_custom_call.1} parent=23 // pred_fallthru
          _
        %s130 = sand.u32 %s26, 1
        %s131 = scalar_lea.sflag [#allocation3], %s130
        %s132 = sand.u32 %s26, 1
        %s133 = smul.addr %s132, 784
        %s134 = scalar_lea.vmem [#allocation2], %s133
        %p135 = pneg %p39
        %p136 = pneg %p36
        %p137 = pneg %p65
        %p138 = pneg %p62
        %s139 = sand.u32 %s52, 1
        %s140 = scalar_lea.sflag [#allocation4], %s139
        %s141 = sand.u32 %s52, 1
        %s142 = scalar_lea.vmem [#allocation5], %s141
        %s143 = smul.u32 98, %s18
        %s144 = ssub.s32 195, %s143
        %p145 = scmp.lt.s32.totalorder %s144, 98
        %s146 = scalar_select %p145, %s144, 98
        %s147 = smul.u32 8, %s146
        %v148 = vld [vmem:[%s124] sm:$0xff]
        %v149 = vld [vmem:[%s124 + $0x8] sm:$0xff]
        %v150 = vld [vmem:[%s124 + $0x10] sm:$0xff]
        %v151 = vld [vmem:[%s124 + $0x18] sm:$0xff]
        %v152 = vld [vmem:[%s124 + $0x20] sm:$0xff]
        %v153 = vld [vmem:[%s124 + $0x28] sm:$0xff]
        %v154 = vld [vmem:[%s124 + $0x30] sm:$0xff]
        %v155 = vld [vmem:[%s124 + $0x38] sm:$0xff]
        %v156 = vld [vmem:[%s124 + $0x40] sm:$0xff]
        %v157 = vld [vmem:[%s124 + $0x48] sm:$0xff]
        %v158 = vld [vmem:[%s124 + $0x50] sm:$0xff]
        %v159 = vld [vmem:[%s124 + $0x58] sm:$0xff]
        %v160 = vld [vmem:[%s124 + $0x60] sm:$0xff]
        %v161 = vld [vmem:[%s124 + $0x68] sm:$0xff]
        %v162 = vld [vmem:[%s124 + $0x70] sm:$0xff]
        %v163 = vld [vmem:[%s124 + $0x78] sm:$0xff]
        %v164 = vld [vmem:[%s124 + $0x80] sm:$0xff]
        %v165 = vld [vmem:[%s124 + $0x88] sm:$0xff]
        %v166 = vld [vmem:[%s124 + $0x90] sm:$0xff]
        %v167 = vld [vmem:[%s124 + $0x98] sm:$0xff]
        %v168 = vld [vmem:[%s124 + $0xa0] sm:$0xff]
        %v169 = vld [vmem:[%s124 + $0xa8] sm:$0xff]
        %v170 = vld [vmem:[%s124 + $0xb0] sm:$0xff]
        %v171 = vld [vmem:[%s124 + $0xb8] sm:$0xff]
        %v172 = vld [vmem:[%s124 + $0xc0] sm:$0xff]
        %v173 = vld [vmem:[%s124 + $0xc8] sm:$0xff]
        %v174 = vld [vmem:[%s124 + $0xd0] sm:$0xff]
        %v175 = vld [vmem:[%s124 + $0xd8] sm:$0xff]
        %v176 = vld [vmem:[%s124 + $0xe0] sm:$0xff]
        %v177 = vld [vmem:[%s124 + $0xe8] sm:$0xff]
        %v178 = vld [vmem:[%s124 + $0xf0] sm:$0xff]
        %v179 = vld [vmem:[%s124 + $0xf8] sm:$0xff]
        %v180 = vld [vmem:[%s124 + $0x100] sm:$0xff]
        %v181 = vld [vmem:[%s124 + $0x108] sm:$0xff]
        %v182 = vld [vmem:[%s124 + $0x110] sm:$0xff]
        %v183 = vld [vmem:[%s124 + $0x118] sm:$0xff]
        %v184 = vld [vmem:[%s124 + $0x120] sm:$0xff]
        %v185 = vld [vmem:[%s124 + $0x128] sm:$0xff]
        %v186 = vld [vmem:[%s124 + $0x130] sm:$0xff]
        %v187 = vld [vmem:[%s124 + $0x138] sm:$0xff]
        %v188 = vld [vmem:[%s124 + $0x140] sm:$0xff]
        %v189 = vld [vmem:[%s124 + $0x148] sm:$0xff]
        %v190 = vld [vmem:[%s124 + $0x150] sm:$0xff]
        %v191 = vld [vmem:[%s124 + $0x158] sm:$0xff]
        %v192 = vld [vmem:[%s124 + $0x160] sm:$0xff]
        %v193 = vld [vmem:[%s124 + $0x168] sm:$0xff]
        %v194 = vld [vmem:[%s124 + $0x170] sm:$0xff]
        %v195 = vld [vmem:[%s124 + $0x178] sm:$0xff]
        %v196 = vld [vmem:[%s124 + $0x180] sm:$0xff]
        %v197 = vld [vmem:[%s124 + $0x188] sm:$0xff]
        %v198 = vld [vmem:[%s124 + $0x190] sm:$0xff]
        %v199 = vld [vmem:[%s124 + $0x198] sm:$0xff]
        %v200 = vld [vmem:[%s124 + $0x1a0] sm:$0xff]
        %v201 = vld [vmem:[%s124 + $0x1a8] sm:$0xff]
        %v202 = vld [vmem:[%s124 + $0x1b0] sm:$0xff]
        %v203 = vld [vmem:[%s124 + $0x1b8] sm:$0xff]
        %v204 = vld [vmem:[%s124 + $0x1c0] sm:$0xff]
        %v205 = vld [vmem:[%s124 + $0x1c8] sm:$0xff]
        %v206 = vld [vmem:[%s124 + $0x1d0] sm:$0xff]
        %v207 = vld [vmem:[%s124 + $0x1d8] sm:$0xff]
        %v208 = vld [vmem:[%s124 + $0x1e0] sm:$0xff]
        %v209 = vld [vmem:[%s124 + $0x1e8] sm:$0xff]
        %v210 = vld [vmem:[%s124 + $0x1f0] sm:$0xff]
        %v211 = vld [vmem:[%s124 + $0x1f8] sm:$0xff]
        %v212 = vld [vmem:[%s124 + $0x200] sm:$0xff]
        %v213 = vld [vmem:[%s124 + $0x208] sm:$0xff]
        %v214 = vld [vmem:[%s124 + $0x210] sm:$0xff]
        %v215 = vld [vmem:[%s124 + $0x218] sm:$0xff]
        %v216 = vld [vmem:[%s124 + $0x220] sm:$0xff]
        %v217 = vld [vmem:[%s124 + $0x228] sm:$0xff]
        %v218 = vld [vmem:[%s124 + $0x230] sm:$0xff]
        %v219 = vld [vmem:[%s124 + $0x238] sm:$0xff]
        %v220 = vld [vmem:[%s124 + $0x240] sm:$0xff]
        %v221 = vld [vmem:[%s124 + $0x248] sm:$0xff]
        %v222 = vld [vmem:[%s124 + $0x250] sm:$0xff]
        %v223 = vld [vmem:[%s124 + $0x258] sm:$0xff]
        %v224 = vld [vmem:[%s124 + $0x260] sm:$0xff]
        %v225 = vld [vmem:[%s124 + $0x268] sm:$0xff]
        %v226 = vld [vmem:[%s124 + $0x270] sm:$0xff]
        %v227 = vld [vmem:[%s124 + $0x278] sm:$0xff]
        %v228 = vld [vmem:[%s124 + $0x280] sm:$0xff]
        %v229 = vld [vmem:[%s124 + $0x288] sm:$0xff]
        %v230 = vld [vmem:[%s124 + $0x290] sm:$0xff]
        %v231 = vld [vmem:[%s124 + $0x298] sm:$0xff]
        %v232 = vld [vmem:[%s124 + $0x2a0] sm:$0xff]
        %v233 = vld [vmem:[%s124 + $0x2a8] sm:$0xff]
        %v234 = vld [vmem:[%s124 + $0x2b0] sm:$0xff]
        %v235 = vld [vmem:[%s124 + $0x2b8] sm:$0xff]
        %v236 = vld [vmem:[%s124 + $0x2c0] sm:$0xff]
        %v237 = vld [vmem:[%s124 + $0x2c8] sm:$0xff]
        %v238 = vld [vmem:[%s124 + $0x2d0] sm:$0xff]
        %v239 = vld [vmem:[%s124 + $0x2d8] sm:$0xff]
        %v240 = vld [vmem:[%s124 + $0x2e0] sm:$0xff]
        %v241 = vld [vmem:[%s124 + $0x2e8] sm:$0xff]
        %v242 = vld [vmem:[%s124 + $0x2f0] sm:$0xff]
        %v243 = vld [vmem:[%s124 + $0x2f8] sm:$0xff]
        %v244 = vld [vmem:[%s124 + $0x300] sm:$0xff]
        %v245 = vld [vmem:[%s124 + $0x308] sm:$0xff]
        %v246 = vmul.f32 %v148, %v148
        %v247 = vmul.f32 %v149, %v149
        %v248 = vmul.f32 %v150, %v150
        %v249 = vmul.f32 %v151, %v151
        %v250 = vmul.f32 %v152, %v152
        %v251 = vmul.f32 %v153, %v153
        %v252 = vmul.f32 %v154, %v154
        %v253 = vmul.f32 %v155, %v155
        %v254 = vmul.f32 %v156, %v156
        %v255 = vmul.f32 %v157, %v157
        %v256 = vmul.f32 %v158, %v158
        %v257 = vmul.f32 %v159, %v159
        %v258 = vmul.f32 %v160, %v160
        %v259 = vmul.f32 %v161, %v161
        %v260 = vmul.f32 %v162, %v162
        %v261 = vmul.f32 %v163, %v163
        %v262 = vmul.f32 %v164, %v164
        %v263 = vmul.f32 %v165, %v165
        %v264 = vmul.f32 %v166, %v166
        %v265 = vmul.f32 %v167, %v167
        %v266 = vmul.f32 %v168, %v168
        %v267 = vmul.f32 %v169, %v169
        %v268 = vmul.f32 %v170, %v170
        %v269 = vmul.f32 %v171, %v171
        %v270 = vmul.f32 %v172, %v172
        %v271 = vmul.f32 %v173, %v173
        %v272 = vmul.f32 %v174, %v174
        %v273 = vmul.f32 %v175, %v175
        %v274 = vmul.f32 %v176, %v176
        %v275 = vmul.f32 %v177, %v177
        %v276 = vmul.f32 %v178, %v178
        %v277 = vmul.f32 %v179, %v179
        %v278 = vmul.f32 %v180, %v180
        %v279 = vmul.f32 %v181, %v181
        %v280 = vmul.f32 %v182, %v182
        %v281 = vmul.f32 %v183, %v183
        %v282 = vmul.f32 %v184, %v184
        %v283 = vmul.f32 %v185, %v185
        %v284 = vmul.f32 %v186, %v186
        %v285 = vmul.f32 %v187, %v187
        %v286 = vmul.f32 %v188, %v188
        %v287 = vmul.f32 %v189, %v189
        %v288 = vmul.f32 %v190, %v190
        %v289 = vmul.f32 %v191, %v191
        %v290 = vmul.f32 %v192, %v192
        %v291 = vmul.f32 %v193, %v193
        %v292 = vmul.f32 %v194, %v194
        %v293 = vmul.f32 %v195, %v195
        %v294 = vmul.f32 %v196, %v196
        %v295 = vmul.f32 %v197, %v197
        %v296 = vmul.f32 %v198, %v198
        %v297 = vmul.f32 %v199, %v199
        %v298 = vmul.f32 %v200, %v200
        %v299 = vmul.f32 %v201, %v201
        %v300 = vmul.f32 %v202, %v202
        %v301 = vmul.f32 %v203, %v203
        %v302 = vmul.f32 %v204, %v204
        %v303 = vmul.f32 %v205, %v205
        %v304 = vmul.f32 %v206, %v206
        %v305 = vmul.f32 %v207, %v207
        %v306 = vmul.f32 %v208, %v208
        %v307 = vmul.f32 %v209, %v209
        %v308 = vmul.f32 %v210, %v210
        %v309 = vmul.f32 %v211, %v211
        %v310 = vmul.f32 %v212, %v212
        %v311 = vmul.f32 %v213, %v213
        %v312 = vmul.f32 %v214, %v214
        %v313 = vmul.f32 %v215, %v215
        %v314 = vmul.f32 %v216, %v216
        %v315 = vmul.f32 %v217, %v217
        %v316 = vmul.f32 %v218, %v218
        %v317 = vmul.f32 %v219, %v219
        %v318 = vmul.f32 %v220, %v220
        %v319 = vmul.f32 %v221, %v221
        %v320 = vmul.f32 %v222, %v222
        %v321 = vmul.f32 %v223, %v223
        %v322 = vmul.f32 %v224, %v224
        %v323 = vmul.f32 %v225, %v225
        %v324 = vmul.f32 %v226, %v226
        %v325 = vmul.f32 %v227, %v227
        %v326 = vmul.f32 %v228, %v228
        %v327 = vmul.f32 %v229, %v229
        %v328 = vmul.f32 %v230, %v230
        %v329 = vmul.f32 %v231, %v231
        %v330 = vmul.f32 %v232, %v232
        %v331 = vmul.f32 %v233, %v233
        %v332 = vmul.f32 %v234, %v234
        %v333 = vmul.f32 %v235, %v235
        %v334 = vmul.f32 %v236, %v236
        %v335 = vmul.f32 %v237, %v237
        %v336 = vmul.f32 %v238, %v238
        %v337 = vmul.f32 %v239, %v239
        %v338 = vmul.f32 %v240, %v240
        %v339 = vmul.f32 %v241, %v241
        %v340 = vmul.f32 %v242, %v242
        %v341 = vmul.f32 %v243, %v243
        %v342 = vmul.f32 %v244, %v244
        %v343 = vmul.f32 %v245, %v245
        %s344 = smul.u32 %s18, 784
        %v345 = vlaneseq
        %v346 = vshrl.u32 %v345, 7
        %v347 = vadd.s32 %v346, 8
        %v348 = vadd.s32 %v346, 16
        %v349 = vadd.s32 %v346, 24
        %v350 = vadd.s32 %v346, 32
        %v351 = vadd.s32 %v346, 40
        %v352 = vadd.s32 %v346, 48
        %v353 = vadd.s32 %v346, 56
        %v354 = vadd.s32 %v346, 64
        %v355 = vadd.s32 %v346, 72
        %v356 = vadd.s32 %v346, 80
        %v357 = vadd.s32 %v346, 88
        %v358 = vadd.s32 %v346, 96
        %v359 = vadd.s32 %v346, 104
        %v360 = vadd.s32 %v346, 112
        %v361 = vadd.s32 %v346, 120
        %v362 = vadd.s32 %v346, 128
        %v363 = vadd.s32 %v346, 136
        %v364 = vadd.s32 %v346, 144
        %v365 = vadd.s32 %v346, 152
        %v366 = vadd.s32 %v346, 160
        %v367 = vadd.s32 %v346, 168
        %v368 = vadd.s32 %v346, 176
        %v369 = vadd.s32 %v346, 184
        %v370 = vadd.s32 %v346, 192
        %v371 = vadd.s32 %v346, 200
        %v372 = vadd.s32 %v346, 208
        %v373 = vadd.s32 %v346, 216
        %v374 = vadd.s32 %v346, 224
        %v375 = vadd.s32 %v346, 232
        %v376 = vadd.s32 %v346, 240
        %v377 = vadd.s32 %v346, 248
        %v378 = vadd.s32 %v346, 256
        %v379 = vadd.s32 %v346, 264
        %v380 = vadd.s32 %v346, 272
        %v381 = vadd.s32 %v346, 280
        %v382 = vadd.s32 %v346, 288
        %v383 = vadd.s32 %v346, 296
        %v384 = vadd.s32 %v346, 304
        %v385 = vadd.s32 %v346, 312
        %v386 = vadd.s32 %v346, 320
        %v387 = vadd.s32 %v346, 328
        %v388 = vadd.s32 %v346, 336
        %v389 = vadd.s32 %v346, 344
        %v390 = vadd.s32 %v346, 352
        %v391 = vadd.s32 %v346, 360
        %v392 = vadd.s32 %v346, 368
        %v393 = vadd.s32 %v346, 376
        %v394 = vadd.s32 %v346, 384
        %v395 = vadd.s32 %v346, 392
        %v396 = vadd.s32 %v346, 400
        %v397 = vadd.s32 %v346, 408
        %v398 = vadd.s32 %v346, 416
        %v399 = vadd.s32 %v346, 424
        %v400 = vadd.s32 %v346, 432
        %v401 = vadd.s32 %v346, 440
        %v402 = vadd.s32 %v346, 448
        %v403 = vadd.s32 %v346, 456
        %v404 = vadd.s32 %v346, 464
        %v405 = vadd.s32 %v346, 472
        %v406 = vadd.s32 %v346, 480
        %v407 = vadd.s32 %v346, 488
        %v408 = vadd.s32 %v346, 496
        %v409 = vadd.s32 %v346, 504
        %v410 = vadd.s32 %v346, 512
        %v411 = vadd.s32 %v346, 520
        %v412 = vadd.s32 %v346, 528
        %v413 = vadd.s32 %v346, 536
        %v414 = vadd.s32 %v346, 544
        %v415 = vadd.s32 %v346, 552
        %v416 = vadd.s32 %v346, 560
        %v417 = vadd.s32 %v346, 568
        %v418 = vadd.s32 %v346, 576
        %v419 = vadd.s32 %v346, 584
        %v420 = vadd.s32 %v346, 592
        %v421 = vadd.s32 %v346, 600
        %v422 = vadd.s32 %v346, 608
        %v423 = vadd.s32 %v346, 616
        %v424 = vadd.s32 %v346, 624
        %v425 = vadd.s32 %v346, 632
        %v426 = vadd.s32 %v346, 640
        %v427 = vadd.s32 %v346, 648
        %v428 = vadd.s32 %v346, 656
        %v429 = vadd.s32 %v346, 664
        %v430 = vadd.s32 %v346, 672
        %v431 = vadd.s32 %v346, 680
        %v432 = vadd.s32 %v346, 688
        %v433 = vadd.s32 %v346, 696
        %v434 = vadd.s32 %v346, 704
        %v435 = vadd.s32 %v346, 712
        %v436 = vadd.s32 %v346, 720
        %v437 = vadd.s32 %v346, 728
        %v438 = vadd.s32 %v346, 736
        %v439 = vadd.s32 %v346, 744
        %v440 = vadd.s32 %v346, 752
        %v441 = vadd.s32 %v346, 760
        %v442 = vadd.s32 %v346, 768
        %v443 = vadd.s32 %v346, 776
        %v444 = vstv %s344
        %v445 = vadd.s32 %v444, %v346
        %v446 = vadd.s32 %v444, %v347
        %v447 = vadd.s32 %v444, %v348
        %v448 = vadd.s32 %v444, %v349
        %v449 = vadd.s32 %v444, %v350
        %v450 = vadd.s32 %v444, %v351
        %v451 = vadd.s32 %v444, %v352
        %v452 = vadd.s32 %v444, %v353
        %v453 = vadd.s32 %v444, %v354
        %v454 = vadd.s32 %v444, %v355
        %v455 = vadd.s32 %v444, %v356
        %v456 = vadd.s32 %v444, %v357
        %v457 = vadd.s32 %v444, %v358
        %v458 = vadd.s32 %v444, %v359
        %v459 = vadd.s32 %v444, %v360
        %v460 = vadd.s32 %v444, %v361
        %v461 = vadd.s32 %v444, %v362
        %v462 = vadd.s32 %v444, %v363
        %v463 = vadd.s32 %v444, %v364
        %v464 = vadd.s32 %v444, %v365
        %v465 = vadd.s32 %v444, %v366
        %v466 = vadd.s32 %v444, %v367
        %v467 = vadd.s32 %v444, %v368
        %v468 = vadd.s32 %v444, %v369
        %v469 = vadd.s32 %v444, %v370
        %v470 = vadd.s32 %v444, %v371
        %v471 = vadd.s32 %v444, %v372
        %v472 = vadd.s32 %v444, %v373
        %v473 = vadd.s32 %v444, %v374
        %v474 = vadd.s32 %v444, %v375
        %v475 = vadd.s32 %v444, %v376
        %v476 = vadd.s32 %v444, %v377
        %v477 = vadd.s32 %v444, %v378
        %v478 = vadd.s32 %v444, %v379
        %v479 = vadd.s32 %v444, %v380
        %v480 = vadd.s32 %v444, %v381
        %v481 = vadd.s32 %v444, %v382
        %v482 = vadd.s32 %v444, %v383
        %v483 = vadd.s32 %v444, %v384
        %v484 = vadd.s32 %v444, %v385
        %v485 = vadd.s32 %v444, %v386
        %v486 = vadd.s32 %v444, %v387
        %v487 = vadd.s32 %v444, %v388
        %v488 = vadd.s32 %v444, %v389
        %v489 = vadd.s32 %v444, %v390
        %v490 = vadd.s32 %v444, %v391
        %v491 = vadd.s32 %v444, %v392
        %v492 = vadd.s32 %v444, %v393
        %v493 = vadd.s32 %v444, %v394
        %v494 = vadd.s32 %v444, %v395
        %v495 = vadd.s32 %v444, %v396
        %v496 = vadd.s32 %v444, %v397
        %v497 = vadd.s32 %v444, %v398
        %v498 = vadd.s32 %v444, %v399
        %v499 = vadd.s32 %v444, %v400
        %v500 = vadd.s32 %v444, %v401
        %v501 = vadd.s32 %v444, %v402
        %v502 = vadd.s32 %v444, %v403
        %v503 = vadd.s32 %v444, %v404
        %v504 = vadd.s32 %v444, %v405
        %v505 = vadd.s32 %v444, %v406
        %v506 = vadd.s32 %v444, %v407
        %v507 = vadd.s32 %v444, %v408
        %v508 = vadd.s32 %v444, %v409
        %v509 = vadd.s32 %v444, %v410
        %v510 = vadd.s32 %v444, %v411
        %v511 = vadd.s32 %v444, %v412
        %v512 = vadd.s32 %v444, %v413
        %v513 = vadd.s32 %v444, %v414
        %v514 = vadd.s32 %v444, %v415
        %v515 = vadd.s32 %v444, %v416
        %v516 = vadd.s32 %v444, %v417
        %v517 = vadd.s32 %v444, %v418
        %v518 = vadd.s32 %v444, %v419
        %v519 = vadd.s32 %v444, %v420
        %v520 = vadd.s32 %v444, %v421
        %v521 = vadd.s32 %v444, %v422
        %v522 = vadd.s32 %v444, %v423
        %v523 = vadd.s32 %v444, %v424
        %v524 = vadd.s32 %v444, %v425
        %v525 = vadd.s32 %v444, %v426
        %v526 = vadd.s32 %v444, %v427
        %v527 = vadd.s32 %v444, %v428
        %v528 = vadd.s32 %v444, %v429
        %v529 = vadd.s32 %v444, %v430
        %v530 = vadd.s32 %v444, %v431
        %v531 = vadd.s32 %v444, %v432
        %v532 = vadd.s32 %v444, %v433
        %v533 = vadd.s32 %v444, %v434
        %v534 = vadd.s32 %v444, %v435
        %v535 = vadd.s32 %v444, %v436
        %v536 = vadd.s32 %v444, %v437
        %v537 = vadd.s32 %v444, %v438
        %v538 = vadd.s32 %v444, %v439
        %v539 = vadd.s32 %v444, %v440
        %v540 = vadd.s32 %v444, %v441
        %v541 = vadd.s32 %v444, %v442
        %v542 = vadd.s32 %v444, %v443
        %vm543 = vcmp.lt.s32.totalorder %v445, 1560
        %vm544 = vcmp.lt.s32.totalorder %v446, 1560
        %vm545 = vcmp.lt.s32.totalorder %v447, 1560
        %vm546 = vcmp.lt.s32.totalorder %v448, 1560
        %vm547 = vcmp.lt.s32.totalorder %v449, 1560
        %vm548 = vcmp.lt.s32.totalorder %v450, 1560
        %vm549 = vcmp.lt.s32.totalorder %v451, 1560
        %vm550 = vcmp.lt.s32.totalorder %v452, 1560
        %vm551 = vcmp.lt.s32.totalorder %v453, 1560
        %vm552 = vcmp.lt.s32.totalorder %v454, 1560
        %vm553 = vcmp.lt.s32.totalorder %v455, 1560
        %vm554 = vcmp.lt.s32.totalorder %v456, 1560
        %vm555 = vcmp.lt.s32.totalorder %v457, 1560
        %vm556 = vcmp.lt.s32.totalorder %v458, 1560
        %vm557 = vcmp.lt.s32.totalorder %v459, 1560
        %vm558 = vcmp.lt.s32.totalorder %v460, 1560
        %vm559 = vcmp.lt.s32.totalorder %v461, 1560
        %vm560 = vcmp.lt.s32.totalorder %v462, 1560
        %vm561 = vcmp.lt.s32.totalorder %v463, 1560
        %vm562 = vcmp.lt.s32.totalorder %v464, 1560
        %vm563 = vcmp.lt.s32.totalorder %v465, 1560
        %vm564 = vcmp.lt.s32.totalorder %v466, 1560
        %vm565 = vcmp.lt.s32.totalorder %v467, 1560
        %vm566 = vcmp.lt.s32.totalorder %v468, 1560
        %vm567 = vcmp.lt.s32.totalorder %v469, 1560
        %vm568 = vcmp.lt.s32.totalorder %v470, 1560
        %vm569 = vcmp.lt.s32.totalorder %v471, 1560
        %vm570 = vcmp.lt.s32.totalorder %v472, 1560
        %vm571 = vcmp.lt.s32.totalorder %v473, 1560
        %vm572 = vcmp.lt.s32.totalorder %v474, 1560
        %vm573 = vcmp.lt.s32.totalorder %v475, 1560
        %vm574 = vcmp.lt.s32.totalorder %v476, 1560
        %vm575 = vcmp.lt.s32.totalorder %v477, 1560
        %vm576 = vcmp.lt.s32.totalorder %v478, 1560
        %vm577 = vcmp.lt.s32.totalorder %v479, 1560
        %vm578 = vcmp.lt.s32.totalorder %v480, 1560
        %vm579 = vcmp.lt.s32.totalorder %v481, 1560
        %vm580 = vcmp.lt.s32.totalorder %v482, 1560
        %vm581 = vcmp.lt.s32.totalorder %v483, 1560
        %vm582 = vcmp.lt.s32.totalorder %v484, 1560
        %vm583 = vcmp.lt.s32.totalorder %v485, 1560
        %vm584 = vcmp.lt.s32.totalorder %v486, 1560
        %vm585 = vcmp.lt.s32.totalorder %v487, 1560
        %vm586 = vcmp.lt.s32.totalorder %v488, 1560
        %vm587 = vcmp.lt.s32.totalorder %v489, 1560
        %vm588 = vcmp.lt.s32.totalorder %v490, 1560
        %vm589 = vcmp.lt.s32.totalorder %v491, 1560
        %vm590 = vcmp.lt.s32.totalorder %v492, 1560
        %vm591 = vcmp.lt.s32.totalorder %v493, 1560
        %vm592 = vcmp.lt.s32.totalorder %v494, 1560
        %vm593 = vcmp.lt.s32.totalorder %v495, 1560
        %vm594 = vcmp.lt.s32.totalorder %v496, 1560
        %vm595 = vcmp.lt.s32.totalorder %v497, 1560
        %vm596 = vcmp.lt.s32.totalorder %v498, 1560
        %vm597 = vcmp.lt.s32.totalorder %v499, 1560
        %vm598 = vcmp.lt.s32.totalorder %v500, 1560
        %vm599 = vcmp.lt.s32.totalorder %v501, 1560
        %vm600 = vcmp.lt.s32.totalorder %v502, 1560
        %vm601 = vcmp.lt.s32.totalorder %v503, 1560
        %vm602 = vcmp.lt.s32.totalorder %v504, 1560
        %vm603 = vcmp.lt.s32.totalorder %v505, 1560
        %vm604 = vcmp.lt.s32.totalorder %v506, 1560
        %vm605 = vcmp.lt.s32.totalorder %v507, 1560
        %vm606 = vcmp.lt.s32.totalorder %v508, 1560
        %vm607 = vcmp.lt.s32.totalorder %v509, 1560
        %vm608 = vcmp.lt.s32.totalorder %v510, 1560
        %vm609 = vcmp.lt.s32.totalorder %v511, 1560
        %vm610 = vcmp.lt.s32.totalorder %v512, 1560
        %vm611 = vcmp.lt.s32.totalorder %v513, 1560
        %vm612 = vcmp.lt.s32.totalorder %v514, 1560
        %vm613 = vcmp.lt.s32.totalorder %v515, 1560
        %vm614 = vcmp.lt.s32.totalorder %v516, 1560
        %vm615 = vcmp.lt.s32.totalorder %v517, 1560
        %vm616 = vcmp.lt.s32.totalorder %v518, 1560
        %vm617 = vcmp.lt.s32.totalorder %v519, 1560
        %vm618 = vcmp.lt.s32.totalorder %v520, 1560
        %vm619 = vcmp.lt.s32.totalorder %v521, 1560
        %vm620 = vcmp.lt.s32.totalorder %v522, 1560
        %vm621 = vcmp.lt.s32.totalorder %v523, 1560
        %vm622 = vcmp.lt.s32.totalorder %v524, 1560
        %vm623 = vcmp.lt.s32.totalorder %v525, 1560
        %vm624 = vcmp.lt.s32.totalorder %v526, 1560
        %vm625 = vcmp.lt.s32.totalorder %v527, 1560
        %vm626 = vcmp.lt.s32.totalorder %v528, 1560
        %vm627 = vcmp.lt.s32.totalorder %v529, 1560
        %vm628 = vcmp.lt.s32.totalorder %v530, 1560
        %vm629 = vcmp.lt.s32.totalorder %v531, 1560
        %vm630 = vcmp.lt.s32.totalorder %v532, 1560
        %vm631 = vcmp.lt.s32.totalorder %v533, 1560
        %vm632 = vcmp.lt.s32.totalorder %v534, 1560
        %vm633 = vcmp.lt.s32.totalorder %v535, 1560
        %vm634 = vcmp.lt.s32.totalorder %v536, 1560
        %vm635 = vcmp.lt.s32.totalorder %v537, 1560
        %vm636 = vcmp.lt.s32.totalorder %v538, 1560
        %vm637 = vcmp.lt.s32.totalorder %v539, 1560
        %vm638 = vcmp.lt.s32.totalorder %v540, 1560
        %vm639 = vcmp.lt.s32.totalorder %v541, 1560
        %vm640 = vcmp.lt.s32.totalorder %v542, 1560
        %v641 = vsel %vm543, 1, 0
        %v642 = vsel %vm544, 1, 0
        %v643 = vsel %vm545, 1, 0
        %v644 = vsel %vm546, 1, 0
        %v645 = vsel %vm547, 1, 0
        %v646 = vsel %vm548, 1, 0
        %v647 = vsel %vm549, 1, 0
        %v648 = vsel %vm550, 1, 0
        %v649 = vsel %vm551, 1, 0
        %v650 = vsel %vm552, 1, 0
        %v651 = vsel %vm553, 1, 0
        %v652 = vsel %vm554, 1, 0
        %v653 = vsel %vm555, 1, 0
        %v654 = vsel %vm556, 1, 0
        %v655 = vsel %vm557, 1, 0
        %v656 = vsel %vm558, 1, 0
        %v657 = vsel %vm559, 1, 0
        %v658 = vsel %vm560, 1, 0
        %v659 = vsel %vm561, 1, 0
        %v660 = vsel %vm562, 1, 0
        %v661 = vsel %vm563, 1, 0
        %v662 = vsel %vm564, 1, 0
        %v663 = vsel %vm565, 1, 0
        %v664 = vsel %vm566, 1, 0
        %v665 = vsel %vm567, 1, 0
        %v666 = vsel %vm568, 1, 0
        %v667 = vsel %vm569, 1, 0
        %v668 = vsel %vm570, 1, 0
        %v669 = vsel %vm571, 1, 0
        %v670 = vsel %vm572, 1, 0
        %v671 = vsel %vm573, 1, 0
        %v672 = vsel %vm574, 1, 0
        %v673 = vsel %vm575, 1, 0
        %v674 = vsel %vm576, 1, 0
        %v675 = vsel %vm577, 1, 0
        %v676 = vsel %vm578, 1, 0
        %v677 = vsel %vm579, 1, 0
        %v678 = vsel %vm580, 1, 0
        %v679 = vsel %vm581, 1, 0
        %v680 = vsel %vm582, 1, 0
        %v681 = vsel %vm583, 1, 0
        %v682 = vsel %vm584, 1, 0
        %v683 = vsel %vm585, 1, 0
        %v684 = vsel %vm586, 1, 0
        %v685 = vsel %vm587, 1, 0
        %v686 = vsel %vm588, 1, 0
        %v687 = vsel %vm589, 1, 0
        %v688 = vsel %vm590, 1, 0
        %v689 = vsel %vm591, 1, 0
        %v690 = vsel %vm592, 1, 0
        %v691 = vsel %vm593, 1, 0
        %v692 = vsel %vm594, 1, 0
        %v693 = vsel %vm595, 1, 0
        %v694 = vsel %vm596, 1, 0
        %v695 = vsel %vm597, 1, 0
        %v696 = vsel %vm598, 1, 0
        %v697 = vsel %vm599, 1, 0
        %v698 = vsel %vm600, 1, 0
        %v699 = vsel %vm601, 1, 0
        %v700 = vsel %vm602, 1, 0
        %v701 = vsel %vm603, 1, 0
        %v702 = vsel %vm604, 1, 0
        %v703 = vsel %vm605, 1, 0
        %v704 = vsel %vm606, 1, 0
        %v705 = vsel %vm607, 1, 0
        %v706 = vsel %vm608, 1, 0
        %v707 = vsel %vm609, 1, 0
        %v708 = vsel %vm610, 1, 0
        %v709 = vsel %vm611, 1, 0
        %v710 = vsel %vm612, 1, 0
        %v711 = vsel %vm613, 1, 0
        %v712 = vsel %vm614, 1, 0
        %v713 = vsel %vm615, 1, 0
        %v714 = vsel %vm616, 1, 0
        %v715 = vsel %vm617, 1, 0
        %v716 = vsel %vm618, 1, 0
        %v717 = vsel %vm619, 1, 0
        %v718 = vsel %vm620, 1, 0
        %v719 = vsel %vm621, 1, 0
        %v720 = vsel %vm622, 1, 0
        %v721 = vsel %vm623, 1, 0
        %v722 = vsel %vm624, 1, 0
        %v723 = vsel %vm625, 1, 0
        %v724 = vsel %vm626, 1, 0
        %v725 = vsel %vm627, 1, 0
        %v726 = vsel %vm628, 1, 0
        %v727 = vsel %vm629, 1, 0
        %v728 = vsel %vm630, 1, 0
        %v729 = vsel %vm631, 1, 0
        %v730 = vsel %vm632, 1, 0
        %v731 = vsel %vm633, 1, 0
        %v732 = vsel %vm634, 1, 0
        %v733 = vsel %vm635, 1, 0
        %v734 = vsel %vm636, 1, 0
        %v735 = vsel %vm637, 1, 0
        %v736 = vsel %vm638, 1, 0
        %v737 = vsel %vm639, 1, 0
        %v738 = vsel %vm640, 1, 0
        %vm739 = vcmp.eq.s32.totalorder %v641, 1
        %vm740 = vcmp.eq.s32.totalorder %v642, 1
        %vm741 = vcmp.eq.s32.totalorder %v643, 1
        %vm742 = vcmp.eq.s32.totalorder %v644, 1
        %vm743 = vcmp.eq.s32.totalorder %v645, 1
        %vm744 = vcmp.eq.s32.totalorder %v646, 1
        %vm745 = vcmp.eq.s32.totalorder %v647, 1
        %vm746 = vcmp.eq.s32.totalorder %v648, 1
        %vm747 = vcmp.eq.s32.totalorder %v649, 1
        %vm748 = vcmp.eq.s32.totalorder %v650, 1
        %vm749 = vcmp.eq.s32.totalorder %v651, 1
        %vm750 = vcmp.eq.s32.totalorder %v652, 1
        %vm751 = vcmp.eq.s32.totalorder %v653, 1
        %vm752 = vcmp.eq.s32.totalorder %v654, 1
        %vm753 = vcmp.eq.s32.totalorder %v655, 1
        %vm754 = vcmp.eq.s32.totalorder %v656, 1
        %vm755 = vcmp.eq.s32.totalorder %v657, 1
        %vm756 = vcmp.eq.s32.totalorder %v658, 1
        %vm757 = vcmp.eq.s32.totalorder %v659, 1
        %vm758 = vcmp.eq.s32.totalorder %v660, 1
        %vm759 = vcmp.eq.s32.totalorder %v661, 1
        %vm760 = vcmp.eq.s32.totalorder %v662, 1
        %vm761 = vcmp.eq.s32.totalorder %v663, 1
        %vm762 = vcmp.eq.s32.totalorder %v664, 1
        %vm763 = vcmp.eq.s32.totalorder %v665, 1
        %vm764 = vcmp.eq.s32.totalorder %v666, 1
        %vm765 = vcmp.eq.s32.totalorder %v667, 1
        %vm766 = vcmp.eq.s32.totalorder %v668, 1
        %vm767 = vcmp.eq.s32.totalorder %v669, 1
        %vm768 = vcmp.eq.s32.totalorder %v670, 1
        %vm769 = vcmp.eq.s32.totalorder %v671, 1
        %vm770 = vcmp.eq.s32.totalorder %v672, 1
        %vm771 = vcmp.eq.s32.totalorder %v673, 1
        %vm772 = vcmp.eq.s32.totalorder %v674, 1
        %vm773 = vcmp.eq.s32.totalorder %v675, 1
        %vm774 = vcmp.eq.s32.totalorder %v676, 1
        %vm775 = vcmp.eq.s32.totalorder %v677, 1
        %vm776 = vcmp.eq.s32.totalorder %v678, 1
        %vm777 = vcmp.eq.s32.totalorder %v679, 1
        %vm778 = vcmp.eq.s32.totalorder %v680, 1
        %vm779 = vcmp.eq.s32.totalorder %v681, 1
        %vm780 = vcmp.eq.s32.totalorder %v682, 1
        %vm781 = vcmp.eq.s32.totalorder %v683, 1
        %vm782 = vcmp.eq.s32.totalorder %v684, 1
        %vm783 = vcmp.eq.s32.totalorder %v685, 1
        %vm784 = vcmp.eq.s32.totalorder %v686, 1
        %vm785 = vcmp.eq.s32.totalorder %v687, 1
        %vm786 = vcmp.eq.s32.totalorder %v688, 1
        %vm787 = vcmp.eq.s32.totalorder %v689, 1
        %vm788 = vcmp.eq.s32.totalorder %v690, 1
        %vm789 = vcmp.eq.s32.totalorder %v691, 1
        %vm790 = vcmp.eq.s32.totalorder %v692, 1
        %vm791 = vcmp.eq.s32.totalorder %v693, 1
        %vm792 = vcmp.eq.s32.totalorder %v694, 1
        %vm793 = vcmp.eq.s32.totalorder %v695, 1
        %vm794 = vcmp.eq.s32.totalorder %v696, 1
        %vm795 = vcmp.eq.s32.totalorder %v697, 1
        %vm796 = vcmp.eq.s32.totalorder %v698, 1
        %vm797 = vcmp.eq.s32.totalorder %v699, 1
        %vm798 = vcmp.eq.s32.totalorder %v700, 1
        %vm799 = vcmp.eq.s32.totalorder %v701, 1
        %vm800 = vcmp.eq.s32.totalorder %v702, 1
        %vm801 = vcmp.eq.s32.totalorder %v703, 1
        %vm802 = vcmp.eq.s32.totalorder %v704, 1
        %vm803 = vcmp.eq.s32.totalorder %v705, 1
        %vm804 = vcmp.eq.s32.totalorder %v706, 1
        %vm805 = vcmp.eq.s32.totalorder %v707, 1
        %vm806 = vcmp.eq.s32.totalorder %v708, 1
        %vm807 = vcmp.eq.s32.totalorder %v709, 1
        %vm808 = vcmp.eq.s32.totalorder %v710, 1
        %vm809 = vcmp.eq.s32.totalorder %v711, 1
        %vm810 = vcmp.eq.s32.totalorder %v712, 1
        %vm811 = vcmp.eq.s32.totalorder %v713, 1
        %vm812 = vcmp.eq.s32.totalorder %v714, 1
        %vm813 = vcmp.eq.s32.totalorder %v715, 1
        %vm814 = vcmp.eq.s32.totalorder %v716, 1
        %vm815 = vcmp.eq.s32.totalorder %v717, 1
        %vm816 = vcmp.eq.s32.totalorder %v718, 1
        %vm817 = vcmp.eq.s32.totalorder %v719, 1
        %vm818 = vcmp.eq.s32.totalorder %v720, 1
        %vm819 = vcmp.eq.s32.totalorder %v721, 1
        %vm820 = vcmp.eq.s32.totalorder %v722, 1
        %vm821 = vcmp.eq.s32.totalorder %v723, 1
        %vm822 = vcmp.eq.s32.totalorder %v724, 1
        %vm823 = vcmp.eq.s32.totalorder %v725, 1
        %vm824 = vcmp.eq.s32.totalorder %v726, 1
        %vm825 = vcmp.eq.s32.totalorder %v727, 1
        %vm826 = vcmp.eq.s32.totalorder %v728, 1
        %vm827 = vcmp.eq.s32.totalorder %v729, 1
        %vm828 = vcmp.eq.s32.totalorder %v730, 1
        %vm829 = vcmp.eq.s32.totalorder %v731, 1
        %vm830 = vcmp.eq.s32.totalorder %v732, 1
        %vm831 = vcmp.eq.s32.totalorder %v733, 1
        %vm832 = vcmp.eq.s32.totalorder %v734, 1
        %vm833 = vcmp.eq.s32.totalorder %v735, 1
        %vm834 = vcmp.eq.s32.totalorder %v736, 1
        %vm835 = vcmp.eq.s32.totalorder %v737, 1
        %vm836 = vcmp.eq.s32.totalorder %v738, 1
        %v837 = vsel %vm739, %v246, 0.0
        %v838 = vsel %vm740, %v247, 0.0
        %v839 = vsel %vm741, %v248, 0.0
        %v840 = vsel %vm742, %v249, 0.0
        %v841 = vsel %vm743, %v250, 0.0
        %v842 = vsel %vm744, %v251, 0.0
        %v843 = vsel %vm745, %v252, 0.0
        %v844 = vsel %vm746, %v253, 0.0
        %v845 = vsel %vm747, %v254, 0.0
        %v846 = vsel %vm748, %v255, 0.0
        %v847 = vsel %vm749, %v256, 0.0
        %v848 = vsel %vm750, %v257, 0.0
        %v849 = vsel %vm751, %v258, 0.0
        %v850 = vsel %vm752, %v259, 0.0
        %v851 = vsel %vm753, %v260, 0.0
        %v852 = vsel %vm754, %v261, 0.0
        %v853 = vsel %vm755, %v262, 0.0
        %v854 = vsel %vm756, %v263, 0.0
        %v855 = vsel %vm757, %v264, 0.0
        %v856 = vsel %vm758, %v265, 0.0
        %v857 = vsel %vm759, %v266, 0.0
        %v858 = vsel %vm760, %v267, 0.0
        %v859 = vsel %vm761, %v268, 0.0
        %v860 = vsel %vm762, %v269, 0.0
        %v861 = vsel %vm763, %v270, 0.0
        %v862 = vsel %vm764, %v271, 0.0
        %v863 = vsel %vm765, %v272, 0.0
        %v864 = vsel %vm766, %v273, 0.0
        %v865 = vsel %vm767, %v274, 0.0
        %v866 = vsel %vm768, %v275, 0.0
        %v867 = vsel %vm769, %v276, 0.0
        %v868 = vsel %vm770, %v277, 0.0
        %v869 = vsel %vm771, %v278, 0.0
        %v870 = vsel %vm772, %v279, 0.0
        %v871 = vsel %vm773, %v280, 0.0
        %v872 = vsel %vm774, %v281, 0.0
        %v873 = vsel %vm775, %v282, 0.0
        %v874 = vsel %vm776, %v283, 0.0
        %v875 = vsel %vm777, %v284, 0.0
        %v876 = vsel %vm778, %v285, 0.0
        %v877 = vsel %vm779, %v286, 0.0
        %v878 = vsel %vm780, %v287, 0.0
        %v879 = vsel %vm781, %v288, 0.0
        %v880 = vsel %vm782, %v289, 0.0
        %v881 = vsel %vm783, %v290, 0.0
        %v882 = vsel %vm784, %v291, 0.0
        %v883 = vsel %vm785, %v292, 0.0
        %v884 = vsel %vm786, %v293, 0.0
        %v885 = vsel %vm787, %v294, 0.0
        %v886 = vsel %vm788, %v295, 0.0
        %v887 = vsel %vm789, %v296, 0.0
        %v888 = vsel %vm790, %v297, 0.0
        %v889 = vsel %vm791, %v298, 0.0
        %v890 = vsel %vm792, %v299, 0.0
        %v891 = vsel %vm793, %v300, 0.0
        %v892 = vsel %vm794, %v301, 0.0
        %v893 = vsel %vm795, %v302, 0.0
        %v894 = vsel %vm796, %v303, 0.0
        %v895 = vsel %vm797, %v304, 0.0
        %v896 = vsel %vm798, %v305, 0.0
        %v897 = vsel %vm799, %v306, 0.0
        %v898 = vsel %vm800, %v307, 0.0
        %v899 = vsel %vm801, %v308, 0.0
        %v900 = vsel %vm802, %v309, 0.0
        %v901 = vsel %vm803, %v310, 0.0
        %v902 = vsel %vm804, %v311, 0.0
        %v903 = vsel %vm805, %v312, 0.0
        %v904 = vsel %vm806, %v313, 0.0
        %v905 = vsel %vm807, %v314, 0.0
        %v906 = vsel %vm808, %v315, 0.0
        %v907 = vsel %vm809, %v316, 0.0
        %v908 = vsel %vm810, %v317, 0.0
        %v909 = vsel %vm811, %v318, 0.0
        %v910 = vsel %vm812, %v319, 0.0
        %v911 = vsel %vm813, %v320, 0.0
        %v912 = vsel %vm814, %v321, 0.0
        %v913 = vsel %vm815, %v322, 0.0
        %v914 = vsel %vm816, %v323, 0.0
        %v915 = vsel %vm817, %v324, 0.0
        %v916 = vsel %vm818, %v325, 0.0
        %v917 = vsel %vm819, %v326, 0.0
        %v918 = vsel %vm820, %v327, 0.0
        %v919 = vsel %vm821, %v328, 0.0
        %v920 = vsel %vm822, %v329, 0.0
        %v921 = vsel %vm823, %v330, 0.0
        %v922 = vsel %vm824, %v331, 0.0
        %v923 = vsel %vm825, %v332, 0.0
        %v924 = vsel %vm826, %v333, 0.0
        %v925 = vsel %vm827, %v334, 0.0
        %v926 = vsel %vm828, %v335, 0.0
        %v927 = vsel %vm829, %v336, 0.0
        %v928 = vsel %vm830, %v337, 0.0
        %v929 = vsel %vm831, %v338, 0.0
        %v930 = vsel %vm832, %v339, 0.0
        %v931 = vsel %vm833, %v340, 0.0
        %v932 = vsel %vm834, %v341, 0.0
        %v933 = vsel %vm835, %v342, 0.0
        %v934 = vsel %vm836, %v343, 0.0
        %v935 = vadd.f32 %v837, %v838
        %v936 = vadd.f32 %v935, %v839
        %v937 = vadd.f32 %v936, %v840
        %v938 = vadd.f32 %v937, %v841
        %v939 = vadd.f32 %v938, %v842
        %v940 = vadd.f32 %v939, %v843
        %v941 = vadd.f32 %v940, %v844
        %v942 = vadd.f32 %v941, %v845
        %v943 = vadd.f32 %v942, %v846
        %v944 = vadd.f32 %v943, %v847
        %v945 = vadd.f32 %v944, %v848
        %v946 = vadd.f32 %v945, %v849
        %v947 = vadd.f32 %v946, %v850
        %v948 = vadd.f32 %v947, %v851
        %v949 = vadd.f32 %v948, %v852
        %v950 = vadd.f32 %v949, %v853
        %v951 = vadd.f32 %v950, %v854
        %v952 = vadd.f32 %v951, %v855
        %v953 = vadd.f32 %v952, %v856
        %v954 = vadd.f32 %v953, %v857
        %v955 = vadd.f32 %v954, %v858
        %v956 = vadd.f32 %v955, %v859
        %v957 = vadd.f32 %v956, %v860
        %v958 = vadd.f32 %v957, %v861
        %v959 = vadd.f32 %v958, %v862
        %v960 = vadd.f32 %v959, %v863
        %v961 = vadd.f32 %v960, %v864
        %v962 = vadd.f32 %v961, %v865
        %v963 = vadd.f32 %v962, %v866
        %v964 = vadd.f32 %v963, %v867
        %v965 = vadd.f32 %v964, %v868
        %v966 = vadd.f32 %v965, %v869
        %v967 = vadd.f32 %v966, %v870
        %v968 = vadd.f32 %v967, %v871
        %v969 = vadd.f32 %v968, %v872
        %v970 = vadd.f32 %v969, %v873
        %v971 = vadd.f32 %v970, %v874
        %v972 = vadd.f32 %v971, %v875
        %v973 = vadd.f32 %v972, %v876
        %v974 = vadd.f32 %v973, %v877
        %v975 = vadd.f32 %v974, %v878
        %v976 = vadd.f32 %v975, %v879
        %v977 = vadd.f32 %v976, %v880
        %v978 = vadd.f32 %v977, %v881
        %v979 = vadd.f32 %v978, %v882
        %v980 = vadd.f32 %v979, %v883
        %v981 = vadd.f32 %v980, %v884
        %v982 = vadd.f32 %v981, %v885
        %v983 = vadd.f32 %v982, %v886
        %v984 = vadd.f32 %v983, %v887
        %v985 = vadd.f32 %v984, %v888
        %v986 = vadd.f32 %v985, %v889
        %v987 = vadd.f32 %v986, %v890
        %v988 = vadd.f32 %v987, %v891
        %v989 = vadd.f32 %v988, %v892
        %v990 = vadd.f32 %v989, %v893
        %v991 = vadd.f32 %v990, %v894
        %v992 = vadd.f32 %v991, %v895
        %v993 = vadd.f32 %v992, %v896
        %v994 = vadd.f32 %v993, %v897
        %v995 = vadd.f32 %v994, %v898
        %v996 = vadd.f32 %v995, %v899
        %v997 = vadd.f32 %v996, %v900
        %v998 = vadd.f32 %v997, %v901
        %v999 = vadd.f32 %v998, %v902
        %v1000 = vadd.f32 %v999, %v903
        %v1001 = vadd.f32 %v1000, %v904
        %v1002 = vadd.f32 %v1001, %v905
        %v1003 = vadd.f32 %v1002, %v906
        %v1004 = vadd.f32 %v1003, %v907
        %v1005 = vadd.f32 %v1004, %v908
        %v1006 = vadd.f32 %v1005, %v909
        %v1007 = vadd.f32 %v1006, %v910
        %v1008 = vadd.f32 %v1007, %v911
        %v1009 = vadd.f32 %v1008, %v912
        %v1010 = vadd.f32 %v1009, %v913
        %v1011 = vadd.f32 %v1010, %v914
        %v1012 = vadd.f32 %v1011, %v915
        %v1013 = vadd.f32 %v1012, %v916
        %v1014 = vadd.f32 %v1013, %v917
        %v1015 = vadd.f32 %v1014, %v918
        %v1016 = vadd.f32 %v1015, %v919
        %v1017 = vadd.f32 %v1016, %v920
        %v1018 = vadd.f32 %v1017, %v921
        %v1019 = vadd.f32 %v1018, %v922
        %v1020 = vadd.f32 %v1019, %v923
        %v1021 = vadd.f32 %v1020, %v924
        %v1022 = vadd.f32 %v1021, %v925
        %v1023 = vadd.f32 %v1022, %v926
        %v1024 = vadd.f32 %v1023, %v927
        %v1025 = vadd.f32 %v1024, %v928
        %v1026 = vadd.f32 %v1025, %v929
        %v1027 = vadd.f32 %v1026, %v930
        %v1028 = vadd.f32 %v1027, %v931
        %v1029 = vadd.f32 %v1028, %v932
        %v1030 = vadd.f32 %v1029, %v933
        %v1031 = vadd.f32 %v1030, %v934
        %v1032 = vrot.slane %v1031, 4
        %v1033 = vadd.f32 %v1031, %v1032
        %v1034 = vrot.slane %v1033, 2
        %v1035 = vadd.f32 %v1033, %v1034
        %v1036 = vrot.slane %v1035, 1
        %v1037 = vadd.f32 %v1035, %v1036
        %1038 = vst [vmem:[%s142] sm:$0x1] %v1037
        %s1039 = sand.u32 %s52, 1
        %s1040 = scalar_lea.sflag [#allocation4], %s1039
        %s1041 = sand.u32 %s52, 1
        %s1042 = scalar_lea.vmem [#allocation5], %s1041
        // Predicated region
        $region29: #{tpu_custom_call.1} parent=23 // pred_check
          %p1043 = pneg %p62
        $region30: #{tpu_custom_call.1} parent=23 // pred_check_branch
          %1045 = sbr.rel (%p1043) target = $region32
        $region31: #{tpu_custom_call.1} parent=23 // pred_region
          %1047 = vsyncadd %s1040, 0
          %s1048 = scalar_lea.hbm %s1, %s18
          %s1050 = sshll.u32 %s1042, 4
          %s1051 = int_to_ptr.vmem [resolvable:$true] %s1050
          %s1052 = sshll.u32 %s1048, 4
          %s1053 = int_to_ptr.hbm [resolvable:$true] %s1052
          %1055 = dma.vmem_to_hbm [thread:$0]  %s1051, 16, %s1053, %s1040
        $region32: #{tpu_custom_call.1} parent=23 // pred_fallthru
          _
      $region24: #{tpu_custom_call.1} parent=5 // pred_fallthru
        _
      %p1056 = scmp.le.s32.totalorder 2, %s13
      // Predicated region
      $region33: #{tpu_custom_call.1} parent=5 // pred_check
        %p1057 = pneg %p1056
      $region34: #{tpu_custom_call.1} parent=5 // pred_check_branch
        %1059 = sbr.rel (%p1057) target = $region36
      $region35: #{tpu_custom_call.1} parent=5 // pred_region
        %s1060 = ssub.s32 %s13, 2
        // Predicated region
        $region37: #{tpu_custom_call.1} parent=35 // pred_check
          %p1061 = pneg %p68
        $region38: #{tpu_custom_call.1} parent=35 // pred_check_branch
          %1063 = sbr.rel (%p1061) target = $region40
        $region39: #{tpu_custom_call.1} parent=35 // pred_region
          %s1064 = sand.u32 %s53, 1
          %s1065 = scalar_lea.sflag [#allocation4], %s1064
          %s1066 = sand.u32 %s53, 1
          %s1067 = scalar_lea.vmem [#allocation5], %s1066
          %1069 = dma.done %s1065, 16
        $region40: #{tpu_custom_call.1} parent=35 // pred_fallthru
          _
      $region36: #{tpu_custom_call.1} parent=5 // pred_fallthru
        _
    $region6: #{tpu_custom_call.1} parent=1 // loop_footer
      %s17 = sadd.s32 1, %s13
    $region7: #{tpu_custom_call.1} parent=1 // loop_footer_branch
      %12 = sbr.rel target = $region3
    $region8: #{tpu_custom_call.1} parent=1 // loop_exit
      _
    %1070 = vsyncpa [#allocation3], 1
    %s1071 = scalar_lea.sflag [#allocation3], 1
    %1072 = vsyncpa %s1071, 1
    %1073 = vsyncpa [#allocation4], 1
    %s1074 = scalar_lea.sflag [#allocation4], 1
    %1075 = vsyncpa %s1074, 1

</llo_original>
